<compile_context>
chip_gen: v7x
topology: tpu7x:2x2x1
jax: 0.10.0
libtpu: 0.0.40
codegen_flags: <defaults>
</compile_context>

<pallas_src>
import jax
import jax.numpy as jnp
from jax.experimental import pallas as pl
from jax.experimental.pallas import tpu as pltpu

LANE = 128  # lane width: hidden + output feature dims padded to a multiple of this


def _leaky_relu(x, slope=0.2):
    return jnp.where(x > 0, x, slope * x)


def _round_up(n, m):
    return ((n + m - 1) // m) * m


def mlp_kernel(x_ref, w1_ref, b1_ref, w2_ref, b2_ref, w3_ref, b3_ref,
               w4_ref, b4_ref, o_ref):
    # Layer 1: Linear(F, nf_pad) + LeakyReLU(0.2)
    h = jnp.dot(x_ref[...], w1_ref[...], preferred_element_type=jnp.float32)
    h = _leaky_relu(h + b1_ref[...])
    # Layer 2: Linear(nf_pad, nf_pad) + LeakyReLU(0.2)
    h = jnp.dot(h, w2_ref[...], preferred_element_type=jnp.float32)
    h = _leaky_relu(h + b2_ref[...])
    # Layer 3: Linear(nf_pad, nf_pad) + LeakyReLU(0.2)
    h = jnp.dot(h, w3_ref[...], preferred_element_type=jnp.float32)
    h = _leaky_relu(h + b3_ref[...])
    # Layer 4: Linear(nf_pad, out_pad)  (no activation, lane-dense store)
    out = jnp.dot(h, w4_ref[...], preferred_element_type=jnp.float32) + b4_ref[...]
    o_ref[...] = out.astype(o_ref.dtype)


def domain_classifier_features(x, padded_params, *, max_tile_rows=512):
    """x: (B, C, H, W) or (B, F). padded_params from pad_params(). Returns (B, 1) f32."""
    B = x.shape[0]
    x2d = x.reshape(B, -1).astype(jnp.float32)  # x.view(x.size(0), -1)
    F = x2d.shape[1]
    w1, b1, w2, b2, w3, b3, w4, b4 = padded_params
    nf_pad = w1.shape[1]
    out_pad = w4.shape[1]

    # Batch tiling: sublane-aligned tile, batch padded to a multiple of it.
    TB = min(max_tile_rows, _round_up(B, 8))
    B_pad = _round_up(B, TB)
    if B_pad != B:
        x2d = jnp.pad(x2d, ((0, B_pad - B), (0, 0)))
    grid = (B_pad // TB,)

    # Explicit VMEM budget: double-buffered x/out tiles + resident weights.
    bytes_needed = (
        2 * TB * F * 4                      # x tile, double buffered
        + F * nf_pad * 4                    # w1 (resident)
        + 2 * nf_pad * nf_pad * 4           # w2, w3 (resident)
        + nf_pad * out_pad * 4              # w4 (resident)
        + 4 * max(nf_pad, out_pad) * 4      # biases
        + 2 * TB * out_pad * 4              # out tile, double buffered
    )
    vmem_limit = int(min(max(bytes_needed + (4 << 20), 16 << 20), 96 << 20))

    x_spec = pl.BlockSpec((TB, F), lambda i: (i, 0))

    def resident(arr):  # full-array block, same index every step -> stays in VMEM
        return pl.BlockSpec(arr.shape, lambda i: (0, 0))

    out_slab = pl.pallas_call(
        mlp_kernel,
        out_shape=jax.ShapeDtypeStruct((B_pad, out_pad), jnp.float32),
        grid=grid,
        in_specs=[
            x_spec,
            resident(w1), resident(b1),
            resident(w2), resident(b2),
            resident(w3), resident(b3),
            resident(w4), resident(b4),
        ],
        out_specs=pl.BlockSpec((TB, out_pad), lambda i: (i, 0)),
        compiler_params=pltpu.CompilerParams(
            dimension_semantics=("parallel",),
            vmem_limit_bytes=vmem_limit,
        ),
    )(x2d, w1, b1, w2, b2, w3, b3, w4, b4)

    return out_slab[:B, :1]


def init_params(key, in_features, nf):
    """True (unpadded) parameters; weights stored (in, out), biases (1, out)."""
    ks = jax.random.split(key, 8)

    def lin(kw, kb, fan_in, fan_out):
        # mimic nn.Linear's uniform(-1/sqrt(fan_in), 1/sqrt(fan_in)) init
        bound = 1.0 / jnp.sqrt(jnp.float32(fan_in))
        w = jax.random.uniform(kw, (fan_in, fan_out), jnp.float32, -bound, bound)
        b = jax.random.uniform(kb, (1, fan_out), jnp.float32, -bound, bound)
        return w, b

    w1, b1 = lin(ks[0], ks[1], in_features, nf)
    w2, b2 = lin(ks[2], ks[3], nf, nf)
    w3, b3 = lin(ks[4], ks[5], nf, nf)
    w4, b4 = lin(ks[6], ks[7], nf, 1)
    return (w1, b1, w2, b2, w3, b3, w4, b4)


def pad_params(params):
    """Zero-pad hidden width and the output column to full 128-lane widths.

    Zero padding is exact: padded hidden columns get weight 0 / bias 0, so they
    stay 0 through LeakyReLU and contribute nothing to later layers; padded
    output columns are identically 0 and are sliced off by the wrapper.
    """
    w1, b1, w2, b2, w3, b3, w4, b4 = params
    nf = w1.shape[1]
    nf_pad = _round_up(max(nf, LANE), LANE)
    out_pad = LANE

    def pad2(a, rows, cols):
        return jnp.pad(a, ((0, rows - a.shape[0]), (0, cols - a.shape[1])))

    w1p = pad2(w1, w1.shape[0], nf_pad)
    b1p = pad2(b1, 1, nf_pad)
    w2p = pad2(w2, nf_pad, nf_pad)
    b2p = pad2(b2, 1, nf_pad)
    w3p = pad2(w3, nf_pad, nf_pad)
    b3p = pad2(b3, 1, nf_pad)
    w4p = pad2(w4, nf_pad, out_pad)
    b4p = pad2(b4, 1, out_pad)
    return (w1p, b1p, w2p, b2p, w3p, b3p, w4p, b4p)


def reference(x, params):
    B = x.shape[0]
    h = x.reshape(B, -1)
    w1, b1, w2, b2, w3, b3, w4, b4 = params
    h = _leaky_relu(h @ w1 + b1)
    h = _leaky_relu(h @ w2 + b2)
    h = _leaky_relu(h @ w3 + b3)
    return h @ w4 + b4


if __name__ == "__main__":
    key = jax.random.PRNGKey(0)
    kx, kp = jax.random.split(key)

    B, C, H, W = 2, 4, 16, 16
    in_features = C * H * W
    nf = 32

    x = jax.random.normal(kx, (B, C, H, W), jnp.float32)
    params = init_params(kp, in_features, nf)
    padded = pad_params(params)

    out = domain_classifier_features(x, padded)
    out = jax.block_until_ready(out)

    ref = reference(x, params)
    assert out.shape == (B, 1), out.shape
    assert jnp.allclose(out, ref, atol=1e-4, rtol=1e-4), (out, ref)

    print("KERNEL_OK")
</pallas_src>

<mosaic_0001>
module attributes {stable_mosaic.version = 11 : i64} {
  func.func @mlp_kernel(%arg0: i32, %arg1: memref<8x1024xf32, #tpu.memory_space<vmem>>, %arg2: memref<1024x128xf32, #tpu.memory_space<vmem>>, %arg3: memref<1x128xf32, #tpu.memory_space<vmem>>, %arg4: memref<128x128xf32, #tpu.memory_space<vmem>>, %arg5: memref<1x128xf32, #tpu.memory_space<vmem>>, %arg6: memref<128x128xf32, #tpu.memory_space<vmem>>, %arg7: memref<1x128xf32, #tpu.memory_space<vmem>>, %arg8: memref<128x128xf32, #tpu.memory_space<vmem>>, %arg9: memref<1x128xf32, #tpu.memory_space<vmem>>, %arg10: memref<8x128xf32, #tpu.memory_space<vmem>>) attributes {dimension_semantics = [#tpu.dimension_semantics<parallel>], iteration_bounds = array<i64: 1>, scalar_prefetch = 0 : i64, scratch_operands = 0 : i64, tpu.core_type = #tpu.core_type<tc>, window_params = [{transform_indices = @transform_0, window_bounds = array<i64: 8, 1024>}, {pipeline_mode = #tpu.pipeline_mode<synchronous>, transform_indices = @transform_1, window_bounds = array<i64: 1024, 128>}, {pipeline_mode = #tpu.pipeline_mode<synchronous>, transform_indices = @transform_2, window_bounds = array<i64: 1, 128>}, {pipeline_mode = #tpu.pipeline_mode<synchronous>, transform_indices = @transform_3, window_bounds = array<i64: 128, 128>}, {pipeline_mode = #tpu.pipeline_mode<synchronous>, transform_indices = @transform_4, window_bounds = array<i64: 1, 128>}, {pipeline_mode = #tpu.pipeline_mode<synchronous>, transform_indices = @transform_5, window_bounds = array<i64: 128, 128>}, {pipeline_mode = #tpu.pipeline_mode<synchronous>, transform_indices = @transform_6, window_bounds = array<i64: 1, 128>}, {pipeline_mode = #tpu.pipeline_mode<synchronous>, transform_indices = @transform_7, window_bounds = array<i64: 128, 128>}, {pipeline_mode = #tpu.pipeline_mode<synchronous>, transform_indices = @transform_8, window_bounds = array<i64: 1, 128>}, {transform_indices = @transform_9, window_bounds = array<i64: 8, 128>}]} {
    %c0 = arith.constant 0 : index
    %c0_0 = arith.constant 0 : index
    %0 = vector.load %arg1[%c0, %c0_0] : memref<8x1024xf32, #tpu.memory_space<vmem>>, vector<8x1024xf32>
    %c0_1 = arith.constant 0 : index
    %c0_2 = arith.constant 0 : index
    %1 = vector.load %arg2[%c0_1, %c0_2] : memref<1024x128xf32, #tpu.memory_space<vmem>>, vector<1024x128xf32>
    %cst = arith.constant dense<0.000000e+00> : vector<8x128xf32>
    %2 = tpu.matmul %0, %1, %cst {dimension_numbers = #tpu.dot_dimension_numbers<[1], [0], [0], [1], [0, 0, 1, 1], [], []>} : vector<8x1024xf32>, vector<1024x128xf32>, vector<8x128xf32> -> vector<8x128xf32>
    %c0_3 = arith.constant 0 : index
    %c0_4 = arith.constant 0 : index
    %3 = vector.load %arg3[%c0_3, %c0_4] : memref<1x128xf32, #tpu.memory_space<vmem>>, vector<1x128xf32>
    %4 = vector.broadcast %3 : vector<1x128xf32> to vector<8x128xf32>
    %5 = arith.addf %2, %4 : vector<8x128xf32>
    %cst_5 = arith.constant 0.000000e+00 : f32
    %6 = vector.broadcast %cst_5 : f32 to vector<8x128xf32>
    %7 = arith.cmpf ogt, %5, %6 : vector<8x128xf32>
    %cst_6 = arith.constant 2.000000e-01 : f32
    %8 = vector.broadcast %cst_6 : f32 to vector<8x128xf32>
    %9 = arith.mulf %8, %5 : vector<8x128xf32>
    %10 = arith.select %7, %5, %9 : vector<8x128xi1>, vector<8x128xf32>
    %c0_7 = arith.constant 0 : index
    %c0_8 = arith.constant 0 : index
    %11 = vector.load %arg4[%c0_7, %c0_8] : memref<128x128xf32, #tpu.memory_space<vmem>>, vector<128x128xf32>
    %cst_9 = arith.constant dense<0.000000e+00> : vector<8x128xf32>
    %12 = tpu.matmul %10, %11, %cst_9 {dimension_numbers = #tpu.dot_dimension_numbers<[1], [0], [0], [1], [0, 0, 1, 1], [], []>} : vector<8x128xf32>, vector<128x128xf32>, vector<8x128xf32> -> vector<8x128xf32>
    %c0_10 = arith.constant 0 : index
    %c0_11 = arith.constant 0 : index
    %13 = vector.load %arg5[%c0_10, %c0_11] : memref<1x128xf32, #tpu.memory_space<vmem>>, vector<1x128xf32>
    %14 = vector.broadcast %13 : vector<1x128xf32> to vector<8x128xf32>
    %15 = arith.addf %12, %14 : vector<8x128xf32>
    %cst_12 = arith.constant 0.000000e+00 : f32
    %16 = vector.broadcast %cst_12 : f32 to vector<8x128xf32>
    %17 = arith.cmpf ogt, %15, %16 : vector<8x128xf32>
    %cst_13 = arith.constant 2.000000e-01 : f32
    %18 = vector.broadcast %cst_13 : f32 to vector<8x128xf32>
    %19 = arith.mulf %18, %15 : vector<8x128xf32>
    %20 = arith.select %17, %15, %19 : vector<8x128xi1>, vector<8x128xf32>
    %c0_14 = arith.constant 0 : index
    %c0_15 = arith.constant 0 : index
    %21 = vector.load %arg6[%c0_14, %c0_15] : memref<128x128xf32, #tpu.memory_space<vmem>>, vector<128x128xf32>
    %cst_16 = arith.constant dense<0.000000e+00> : vector<8x128xf32>
    %22 = tpu.matmul %20, %21, %cst_16 {dimension_numbers = #tpu.dot_dimension_numbers<[1], [0], [0], [1], [0, 0, 1, 1], [], []>} : vector<8x128xf32>, vector<128x128xf32>, vector<8x128xf32> -> vector<8x128xf32>
    %c0_17 = arith.constant 0 : index
    %c0_18 = arith.constant 0 : index
    %23 = vector.load %arg7[%c0_17, %c0_18] : memref<1x128xf32, #tpu.memory_space<vmem>>, vector<1x128xf32>
    %24 = vector.broadcast %23 : vector<1x128xf32> to vector<8x128xf32>
    %25 = arith.addf %22, %24 : vector<8x128xf32>
    %cst_19 = arith.constant 0.000000e+00 : f32
    %26 = vector.broadcast %cst_19 : f32 to vector<8x128xf32>
    %27 = arith.cmpf ogt, %25, %26 : vector<8x128xf32>
    %cst_20 = arith.constant 2.000000e-01 : f32
    %28 = vector.broadcast %cst_20 : f32 to vector<8x128xf32>
    %29 = arith.mulf %28, %25 : vector<8x128xf32>
    %30 = arith.select %27, %25, %29 : vector<8x128xi1>, vector<8x128xf32>
    %c0_21 = arith.constant 0 : index
    %c0_22 = arith.constant 0 : index
    %31 = vector.load %arg8[%c0_21, %c0_22] : memref<128x128xf32, #tpu.memory_space<vmem>>, vector<128x128xf32>
    %cst_23 = arith.constant dense<0.000000e+00> : vector<8x128xf32>
    %32 = tpu.matmul %30, %31, %cst_23 {dimension_numbers = #tpu.dot_dimension_numbers<[1], [0], [0], [1], [0, 0, 1, 1], [], []>} : vector<8x128xf32>, vector<128x128xf32>, vector<8x128xf32> -> vector<8x128xf32>
    %c0_24 = arith.constant 0 : index
    %c0_25 = arith.constant 0 : index
    %33 = vector.load %arg9[%c0_24, %c0_25] : memref<1x128xf32, #tpu.memory_space<vmem>>, vector<1x128xf32>
    %34 = vector.broadcast %33 : vector<1x128xf32> to vector<8x128xf32>
    %35 = arith.addf %32, %34 : vector<8x128xf32>
    %c0_26 = arith.constant 0 : index
    %c0_27 = arith.constant 0 : index
    %36 = vector.load %arg10[%c0_26, %c0_27] : memref<8x128xf32, #tpu.memory_space<vmem>>, vector<8x128xf32>
    tpu.vector_store %arg10[%c0_26, %c0_27], %35 {strides = array<i32>} : memref<8x128xf32, #tpu.memory_space<vmem>>, vector<8x128xf32>,
    return
  }
  func.func @transform_0(%arg0: i32) -> (i32, i32) {
    %c0_i32 = arith.constant 0 : i32
    %c0_i32_0 = arith.constant 0 : i32
    return %arg0, %c0_i32 : i32, i32
  }
  func.func @transform_1(%arg0: i32) -> (i32, i32) {
    %c0_i32 = arith.constant 0 : i32
    %c0_i32_0 = arith.constant 0 : i32
    %c0_i32_1 = arith.constant 0 : i32
    return %c0_i32, %c0_i32_0 : i32, i32
  }
  func.func @transform_2(%arg0: i32) -> (i32, i32) {
    %c0_i32 = arith.constant 0 : i32
    %c0_i32_0 = arith.constant 0 : i32
    %c0_i32_1 = arith.constant 0 : i32
    return %c0_i32, %c0_i32_0 : i32, i32
  }
  func.func @transform_3(%arg0: i32) -> (i32, i32) {
    %c0_i32 = arith.constant 0 : i32
    %c0_i32_0 = arith.constant 0 : i32
    %c0_i32_1 = arith.constant 0 : i32
    return %c0_i32, %c0_i32_0 : i32, i32
  }
  func.func @transform_4(%arg0: i32) -> (i32, i32) {
    %c0_i32 = arith.constant 0 : i32
    %c0_i32_0 = arith.constant 0 : i32
    %c0_i32_1 = arith.constant 0 : i32
    return %c0_i32, %c0_i32_0 : i32, i32
  }
  func.func @transform_5(%arg0: i32) -> (i32, i32) {
    %c0_i32 = arith.constant 0 : i32
    %c0_i32_0 = arith.constant 0 : i32
    %c0_i32_1 = arith.constant 0 : i32
    return %c0_i32, %c0_i32_0 : i32, i32
  }
  func.func @transform_6(%arg0: i32) -> (i32, i32) {
    %c0_i32 = arith.constant 0 : i32
    %c0_i32_0 = arith.constant 0 : i32
    %c0_i32_1 = arith.constant 0 : i32
    return %c0_i32, %c0_i32_0 : i32, i32
  }
  func.func @transform_7(%arg0: i32) -> (i32, i32) {
    %c0_i32 = arith.constant 0 : i32
    %c0_i32_0 = arith.constant 0 : i32
    %c0_i32_1 = arith.constant 0 : i32
    return %c0_i32, %c0_i32_0 : i32, i32
  }
  func.func @transform_8(%arg0: i32) -> (i32, i32) {
    %c0_i32 = arith.constant 0 : i32
    %c0_i32_0 = arith.constant 0 : i32
    %c0_i32_1 = arith.constant 0 : i32
    return %c0_i32, %c0_i32_0 : i32, i32
  }
  func.func @transform_9(%arg0: i32) -> (i32, i32) {
    %c0_i32 = arith.constant 0 : i32
    %c0_i32_0 = arith.constant 0 : i32
    return %arg0, %c0_i32 : i32, i32
  }
}

</mosaic_0001>

<llo_original>
// kernel: tpu_custom_call.1
$region0: #{tpu_custom_call.1}
  #allocation0 [shape = 'u32[]', space=smem, size = 0x4, offset = 0x4, fixed_abs, tag = 'smem constant byte address 0x4 - core index']
  #allocation1 [shape = 'u32[144,128]{1,0:T(1,128)}', space=vmem, size = 0x12000, scoped, tag = 'internal scratch']
  %s0 = inlined_call_operand.hbm [shape: f32[8,1024], index: 0, kind: input, shape index: {}]
  %s1 = inlined_call_operand.hbm [shape: f32[1024,128], index: 1, kind: input, shape index: {}]
  %s2 = inlined_call_operand.vmem [shape: f32[1,128], index: 2, kind: input, shape index: {}]
  %s3 = inlined_call_operand.hbm [shape: f32[128,128], index: 3, kind: input, shape index: {}]
  %s4 = inlined_call_operand.vmem [shape: f32[1,128], index: 4, kind: input, shape index: {}]
  %s5 = inlined_call_operand.hbm [shape: f32[128,128], index: 5, kind: input, shape index: {}]
  %s6 = inlined_call_operand.vmem [shape: f32[1,128], index: 6, kind: input, shape index: {}]
  %s7 = inlined_call_operand.hbm [shape: f32[128,128], index: 7, kind: input, shape index: {}]
  %s8 = inlined_call_operand.vmem [shape: f32[1,128], index: 8, kind: input, shape index: {}]
  %s9 = inlined_call_operand.hbm [shape: f32[8,128], index: 9, kind: output, shape index: {}]
  %s10 = sld [smem:[#allocation0]]
  $region66: #{tpu_custom_call.1} parent=0
    _
  %s12 = ssub.s32 1, %s10
  %s13 = scalar_select 0, %s12, %s10
  $region1: #{tpu_custom_call.1} parent=0
    #allocation2 [shape = 'u8[32768]{0}', space=vmem, size = 0x8000, scoped, tag = 'input window, operand 0, single buffered']
    #allocation3 [shape = 's32[1]{0}', space=sflag, size = 0x4, scoped, tag = 'scoped memory for tpu_custom_call.1']
    #allocation4 [shape = 's32[1]{0}', space=sflag, size = 0x4, scoped, tag = 'scoped memory for tpu_custom_call.1']
    #allocation5 [shape = 'u8[524288]{0}', space=vmem, size = 0x80000, scoped, tag = 'input window, operand 1, single buffered']
    #allocation6 [shape = 's32[1]{0}', space=sflag, size = 0x4, scoped, tag = 'scoped memory for tpu_custom_call.1']
    #allocation7 [shape = 'u8[65536]{0}', space=vmem, size = 0x10000, scoped, tag = 'input window, operand 3, single buffered']
    #allocation8 [shape = 'u8[65536]{0}', space=vmem, size = 0x10000, scoped, tag = 'input window, operand 5, single buffered']
    #allocation9 [shape = 's32[1]{0}', space=sflag, size = 0x4, scoped, tag = 'scoped memory for tpu_custom_call.1']
    #allocation10 [shape = 'u8[65536]{0}', space=vmem, size = 0x10000, scoped, tag = 'input window, operand 7, single buffered']
    #allocation11 [shape = 'u8[4096]{0}', space=vmem, size = 0x1000, scoped, tag = 'output window, operand 0, single buffered']
    %14 = vsyncpa [#allocation3], 0
    %15 = vsyncpa [#allocation6], 0
    %16 = vsyncpa [#allocation9], 0
    %17 = vsyncpa [#allocation4], 0
    // Predicated region
    $region2: #{tpu_custom_call.1} parent=1 // pred_check
      _
    $region3: #{tpu_custom_call.1} parent=1 // pred_check_branch
      %19 = sbr.rel (0) target = $region5
    $region4: #{tpu_custom_call.1} parent=1 // pred_region
      %s21 = ssub.s32 1024, 1024
      %22 = vsyncadd [#allocation3], %s21
      %s24 = sshll.u32 [#allocation2], 4
      %s25 = int_to_ptr.vmem [resolvable:$true] %s24
      %27 = dma.hbm_to_vmem [thread:$0]  %s0, 1024, %s25, [#allocation3]
    $region5: #{tpu_custom_call.1} parent=1 // pred_fallthru
      _
    // Predicated region
    $region6: #{tpu_custom_call.1} parent=1 // pred_check
      _
    $region7: #{tpu_custom_call.1} parent=1 // pred_check_branch
      %29 = sbr.rel (0) target = $region9
    $region8: #{tpu_custom_call.1} parent=1 // pred_region
      %s31 = ssub.s32 16384, 16384
      %32 = vsyncadd [#allocation6], %s31
      %s33 = sshll.u32 [#allocation5], 4
      %s34 = int_to_ptr.vmem [resolvable:$true] %s33
      %39 = dma.hbm_to_vmem [thread:$0]  %s1, 16384, %s34, [#allocation6], 128, 128, 8
    $region9: #{tpu_custom_call.1} parent=1 // pred_fallthru
      _
    // Predicated region
    $region10: #{tpu_custom_call.1} parent=1 // pred_check
      _
    $region11: #{tpu_custom_call.1} parent=1 // pred_check_branch
      %41 = sbr.rel (0) target = $region13
    $region12: #{tpu_custom_call.1} parent=1 // pred_region
      _
    $region13: #{tpu_custom_call.1} parent=1 // pred_fallthru
      _
    // Predicated region
    $region14: #{tpu_custom_call.1} parent=1 // pred_check
      _
    $region15: #{tpu_custom_call.1} parent=1 // pred_check_branch
      %43 = sbr.rel (0) target = $region17
    $region16: #{tpu_custom_call.1} parent=1 // pred_region
      %s45 = ssub.s32 2048, 2048
      %46 = vsyncadd [#allocation6], %s45
      %s47 = sshll.u32 [#allocation7], 4
      %s48 = int_to_ptr.vmem [resolvable:$true] %s47
      %53 = dma.hbm_to_vmem [thread:$0]  %s3, 2048, %s48, [#allocation6], 128, 128, 8
    $region17: #{tpu_custom_call.1} parent=1 // pred_fallthru
      _
    // Predicated region
    $region18: #{tpu_custom_call.1} parent=1 // pred_check
      _
    $region19: #{tpu_custom_call.1} parent=1 // pred_check_branch
      %55 = sbr.rel (0) target = $region21
    $region20: #{tpu_custom_call.1} parent=1 // pred_region
      _
    $region21: #{tpu_custom_call.1} parent=1 // pred_fallthru
      _
    // Predicated region
    $region22: #{tpu_custom_call.1} parent=1 // pred_check
      _
    $region23: #{tpu_custom_call.1} parent=1 // pred_check_branch
      %57 = sbr.rel (0) target = $region25
    $region24: #{tpu_custom_call.1} parent=1 // pred_region
      %s59 = ssub.s32 2048, 2048
      %60 = vsyncadd [#allocation9], %s59
      %s61 = sshll.u32 [#allocation8], 4
      %s62 = int_to_ptr.vmem [resolvable:$true] %s61
      %67 = dma.hbm_to_vmem [thread:$0]  %s5, 2048, %s62, [#allocation9], 128, 128, 8
    $region25: #{tpu_custom_call.1} parent=1 // pred_fallthru
      _
    // Predicated region
    $region26: #{tpu_custom_call.1} parent=1 // pred_check
      _
    $region27: #{tpu_custom_call.1} parent=1 // pred_check_branch
      %69 = sbr.rel (0) target = $region29
    $region28: #{tpu_custom_call.1} parent=1 // pred_region
      _
    $region29: #{tpu_custom_call.1} parent=1 // pred_fallthru
      _
    // Predicated region
    $region30: #{tpu_custom_call.1} parent=1 // pred_check
      _
    $region31: #{tpu_custom_call.1} parent=1 // pred_check_branch
      %71 = sbr.rel (0) target = $region33
    $region32: #{tpu_custom_call.1} parent=1 // pred_region
      %s73 = ssub.s32 2048, 2048
      %74 = vsyncadd [#allocation9], %s73
      %s75 = sshll.u32 [#allocation10], 4
      %s76 = int_to_ptr.vmem [resolvable:$true] %s75
      %81 = dma.hbm_to_vmem [thread:$0]  %s7, 2048, %s76, [#allocation9], 128, 128, 8
    $region33: #{tpu_custom_call.1} parent=1 // pred_fallthru
      _
    // Predicated region
    $region34: #{tpu_custom_call.1} parent=1 // pred_check
      _
    $region35: #{tpu_custom_call.1} parent=1 // pred_check_branch
      %83 = sbr.rel (0) target = $region37
    $region36: #{tpu_custom_call.1} parent=1 // pred_region
      _
    $region37: #{tpu_custom_call.1} parent=1 // pred_fallthru
      _
    // Predicated region
    $region38: #{tpu_custom_call.1} parent=1 // pred_check
      _
    $region39: #{tpu_custom_call.1} parent=1 // pred_check_branch
      %85 = sbr.rel (0) target = $region41
    $region40: #{tpu_custom_call.1} parent=1 // pred_region
      %86 = dma.done [#allocation3], 1024
    $region41: #{tpu_custom_call.1} parent=1 // pred_fallthru
      _
    // Predicated region
    $region42: #{tpu_custom_call.1} parent=1 // pred_check
      _
    $region43: #{tpu_custom_call.1} parent=1 // pred_check_branch
      %88 = sbr.rel (0) target = $region45
    $region44: #{tpu_custom_call.1} parent=1 // pred_region
      %89 = dma.done [#allocation6], 16384
    $region45: #{tpu_custom_call.1} parent=1 // pred_fallthru
      _
    // Predicated region
    $region46: #{tpu_custom_call.1} parent=1 // pred_check
      _
    $region47: #{tpu_custom_call.1} parent=1 // pred_check_branch
      %91 = sbr.rel (0) target = $region49
    $region48: #{tpu_custom_call.1} parent=1 // pred_region
      %92 = dma.done [#allocation6], 2048
    $region49: #{tpu_custom_call.1} parent=1 // pred_fallthru
      _
    // Predicated region
    $region50: #{tpu_custom_call.1} parent=1 // pred_check
      _
    $region51: #{tpu_custom_call.1} parent=1 // pred_check_branch
      %94 = sbr.rel (0) target = $region53
    $region52: #{tpu_custom_call.1} parent=1 // pred_region
      %95 = dma.done [#allocation9], 2048
    $region53: #{tpu_custom_call.1} parent=1 // pred_fallthru
      _
    // Predicated region
    $region54: #{tpu_custom_call.1} parent=1 // pred_check
      _
    $region55: #{tpu_custom_call.1} parent=1 // pred_check_branch
      %97 = sbr.rel (0) target = $region57
    $region56: #{tpu_custom_call.1} parent=1 // pred_region
      %98 = dma.done [#allocation9], 2048
    $region57: #{tpu_custom_call.1} parent=1 // pred_fallthru
      _
    %v99 = vld [vmem:[#allocation2] sm:$0xff]
    %v100 = vld [vmem:[#allocation2 + $0x8] sm:$0xff]
    %v101 = vld [vmem:[#allocation2 + $0x10] sm:$0xff]
    %v102 = vld [vmem:[#allocation2 + $0x18] sm:$0xff]
    %v103 = vld [vmem:[#allocation2 + $0x20] sm:$0xff]
    %v104 = vld [vmem:[#allocation2 + $0x28] sm:$0xff]
    %v105 = vld [vmem:[#allocation2 + $0x30] sm:$0xff]
    %v106 = vld [vmem:[#allocation2 + $0x38] sm:$0xff]
    %v107 = vld [vmem:[#allocation5] sm:$0xff]
    %v108 = vld [vmem:[#allocation5 + $0x8] sm:$0xff]
    %v109 = vld [vmem:[#allocation5 + $0x10] sm:$0xff]
    %v110 = vld [vmem:[#allocation5 + $0x18] sm:$0xff]
    %v111 = vld [vmem:[#allocation5 + $0x20] sm:$0xff]
    %v112 = vld [vmem:[#allocation5 + $0x28] sm:$0xff]
    %v113 = vld [vmem:[#allocation5 + $0x30] sm:$0xff]
    %v114 = vld [vmem:[#allocation5 + $0x38] sm:$0xff]
    %v115 = vld [vmem:[#allocation5 + $0x40] sm:$0xff]
    %v116 = vld [vmem:[#allocation5 + $0x48] sm:$0xff]
    %v117 = vld [vmem:[#allocation5 + $0x50] sm:$0xff]
    %v118 = vld [vmem:[#allocation5 + $0x58] sm:$0xff]
    %v119 = vld [vmem:[#allocation5 + $0x60] sm:$0xff]
    %v120 = vld [vmem:[#allocation5 + $0x68] sm:$0xff]
    %v121 = vld [vmem:[#allocation5 + $0x70] sm:$0xff]
    %v122 = vld [vmem:[#allocation5 + $0x78] sm:$0xff]
    %v123 = vld [vmem:[#allocation5 + $0x80] sm:$0xff]
    %v124 = vld [vmem:[#allocation5 + $0x88] sm:$0xff]
    %v125 = vld [vmem:[#allocation5 + $0x90] sm:$0xff]
    %v126 = vld [vmem:[#allocation5 + $0x98] sm:$0xff]
    %v127 = vld [vmem:[#allocation5 + $0xa0] sm:$0xff]
    %v128 = vld [vmem:[#allocation5 + $0xa8] sm:$0xff]
    %v129 = vld [vmem:[#allocation5 + $0xb0] sm:$0xff]
    %v130 = vld [vmem:[#allocation5 + $0xb8] sm:$0xff]
    %v131 = vld [vmem:[#allocation5 + $0xc0] sm:$0xff]
    %v132 = vld [vmem:[#allocation5 + $0xc8] sm:$0xff]
    %v133 = vld [vmem:[#allocation5 + $0xd0] sm:$0xff]
    %v134 = vld [vmem:[#allocation5 + $0xd8] sm:$0xff]
    %v135 = vld [vmem:[#allocation5 + $0xe0] sm:$0xff]
    %v136 = vld [vmem:[#allocation5 + $0xe8] sm:$0xff]
    %v137 = vld [vmem:[#allocation5 + $0xf0] sm:$0xff]
    %v138 = vld [vmem:[#allocation5 + $0xf8] sm:$0xff]
    %v139 = vld [vmem:[#allocation5 + $0x100] sm:$0xff]
    %v140 = vld [vmem:[#allocation5 + $0x108] sm:$0xff]
    %v141 = vld [vmem:[#allocation5 + $0x110] sm:$0xff]
    %v142 = vld [vmem:[#allocation5 + $0x118] sm:$0xff]
    %v143 = vld [vmem:[#allocation5 + $0x120] sm:$0xff]
    %v144 = vld [vmem:[#allocation5 + $0x128] sm:$0xff]
    %v145 = vld [vmem:[#allocation5 + $0x130] sm:$0xff]
    %v146 = vld [vmem:[#allocation5 + $0x138] sm:$0xff]
    %v147 = vld [vmem:[#allocation5 + $0x140] sm:$0xff]
    %v148 = vld [vmem:[#allocation5 + $0x148] sm:$0xff]
    %v149 = vld [vmem:[#allocation5 + $0x150] sm:$0xff]
    %v150 = vld [vmem:[#allocation5 + $0x158] sm:$0xff]
    %v151 = vld [vmem:[#allocation5 + $0x160] sm:$0xff]
    %v152 = vld [vmem:[#allocation5 + $0x168] sm:$0xff]
    %v153 = vld [vmem:[#allocation5 + $0x170] sm:$0xff]
    %v154 = vld [vmem:[#allocation5 + $0x178] sm:$0xff]
    %v155 = vld [vmem:[#allocation5 + $0x180] sm:$0xff]
    %v156 = vld [vmem:[#allocation5 + $0x188] sm:$0xff]
    %v157 = vld [vmem:[#allocation5 + $0x190] sm:$0xff]
    %v158 = vld [vmem:[#allocation5 + $0x198] sm:$0xff]
    %v159 = vld [vmem:[#allocation5 + $0x1a0] sm:$0xff]
    %v160 = vld [vmem:[#allocation5 + $0x1a8] sm:$0xff]
    %v161 = vld [vmem:[#allocation5 + $0x1b0] sm:$0xff]
    %v162 = vld [vmem:[#allocation5 + $0x1b8] sm:$0xff]
    %v163 = vld [vmem:[#allocation5 + $0x1c0] sm:$0xff]
    %v164 = vld [vmem:[#allocation5 + $0x1c8] sm:$0xff]
    %v165 = vld [vmem:[#allocation5 + $0x1d0] sm:$0xff]
    %v166 = vld [vmem:[#allocation5 + $0x1d8] sm:$0xff]
    %v167 = vld [vmem:[#allocation5 + $0x1e0] sm:$0xff]
    %v168 = vld [vmem:[#allocation5 + $0x1e8] sm:$0xff]
    %v169 = vld [vmem:[#allocation5 + $0x1f0] sm:$0xff]
    %v170 = vld [vmem:[#allocation5 + $0x1f8] sm:$0xff]
    %v171 = vld [vmem:[#allocation5 + $0x200] sm:$0xff]
    %v172 = vld [vmem:[#allocation5 + $0x208] sm:$0xff]
    %v173 = vld [vmem:[#allocation5 + $0x210] sm:$0xff]
    %v174 = vld [vmem:[#allocation5 + $0x218] sm:$0xff]
    %v175 = vld [vmem:[#allocation5 + $0x220] sm:$0xff]
    %v176 = vld [vmem:[#allocation5 + $0x228] sm:$0xff]
    %v177 = vld [vmem:[#allocation5 + $0x230] sm:$0xff]
    %v178 = vld [vmem:[#allocation5 + $0x238] sm:$0xff]
    %v179 = vld [vmem:[#allocation5 + $0x240] sm:$0xff]
    %v180 = vld [vmem:[#allocation5 + $0x248] sm:$0xff]
    %v181 = vld [vmem:[#allocation5 + $0x250] sm:$0xff]
    %v182 = vld [vmem:[#allocation5 + $0x258] sm:$0xff]
    %v183 = vld [vmem:[#allocation5 + $0x260] sm:$0xff]
    %v184 = vld [vmem:[#allocation5 + $0x268] sm:$0xff]
    %v185 = vld [vmem:[#allocation5 + $0x270] sm:$0xff]
    %v186 = vld [vmem:[#allocation5 + $0x278] sm:$0xff]
    %v187 = vld [vmem:[#allocation5 + $0x280] sm:$0xff]
    %v188 = vld [vmem:[#allocation5 + $0x288] sm:$0xff]
    %v189 = vld [vmem:[#allocation5 + $0x290] sm:$0xff]
    %v190 = vld [vmem:[#allocation5 + $0x298] sm:$0xff]
    %v191 = vld [vmem:[#allocation5 + $0x2a0] sm:$0xff]
    %v192 = vld [vmem:[#allocation5 + $0x2a8] sm:$0xff]
    %v193 = vld [vmem:[#allocation5 + $0x2b0] sm:$0xff]
    %v194 = vld [vmem:[#allocation5 + $0x2b8] sm:$0xff]
    %v195 = vld [vmem:[#allocation5 + $0x2c0] sm:$0xff]
    %v196 = vld [vmem:[#allocation5 + $0x2c8] sm:$0xff]
    %v197 = vld [vmem:[#allocation5 + $0x2d0] sm:$0xff]
    %v198 = vld [vmem:[#allocation5 + $0x2d8] sm:$0xff]
    %v199 = vld [vmem:[#allocation5 + $0x2e0] sm:$0xff]
    %v200 = vld [vmem:[#allocation5 + $0x2e8] sm:$0xff]
    %v201 = vld [vmem:[#allocation5 + $0x2f0] sm:$0xff]
    %v202 = vld [vmem:[#allocation5 + $0x2f8] sm:$0xff]
    %v203 = vld [vmem:[#allocation5 + $0x300] sm:$0xff]
    %v204 = vld [vmem:[#allocation5 + $0x308] sm:$0xff]
    %v205 = vld [vmem:[#allocation5 + $0x310] sm:$0xff]
    %v206 = vld [vmem:[#allocation5 + $0x318] sm:$0xff]
    %v207 = vld [vmem:[#allocation5 + $0x320] sm:$0xff]
    %v208 = vld [vmem:[#allocation5 + $0x328] sm:$0xff]
    %v209 = vld [vmem:[#allocation5 + $0x330] sm:$0xff]
    %v210 = vld [vmem:[#allocation5 + $0x338] sm:$0xff]
    %v211 = vld [vmem:[#allocation5 + $0x340] sm:$0xff]
    %v212 = vld [vmem:[#allocation5 + $0x348] sm:$0xff]
    %v213 = vld [vmem:[#allocation5 + $0x350] sm:$0xff]
    %v214 = vld [vmem:[#allocation5 + $0x358] sm:$0xff]
    %v215 = vld [vmem:[#allocation5 + $0x360] sm:$0xff]
    %v216 = vld [vmem:[#allocation5 + $0x368] sm:$0xff]
    %v217 = vld [vmem:[#allocation5 + $0x370] sm:$0xff]
    %v218 = vld [vmem:[#allocation5 + $0x378] sm:$0xff]
    %v219 = vld [vmem:[#allocation5 + $0x380] sm:$0xff]
    %v220 = vld [vmem:[#allocation5 + $0x388] sm:$0xff]
    %v221 = vld [vmem:[#allocation5 + $0x390] sm:$0xff]
    %v222 = vld [vmem:[#allocation5 + $0x398] sm:$0xff]
    %v223 = vld [vmem:[#allocation5 + $0x3a0] sm:$0xff]
    %v224 = vld [vmem:[#allocation5 + $0x3a8] sm:$0xff]
    %v225 = vld [vmem:[#allocation5 + $0x3b0] sm:$0xff]
    %v226 = vld [vmem:[#allocation5 + $0x3b8] sm:$0xff]
    %v227 = vld [vmem:[#allocation5 + $0x3c0] sm:$0xff]
    %v228 = vld [vmem:[#allocation5 + $0x3c8] sm:$0xff]
    %v229 = vld [vmem:[#allocation5 + $0x3d0] sm:$0xff]
    %v230 = vld [vmem:[#allocation5 + $0x3d8] sm:$0xff]
    %v231 = vld [vmem:[#allocation5 + $0x3e0] sm:$0xff]
    %v232 = vld [vmem:[#allocation5 + $0x3e8] sm:$0xff]
    %v233 = vld [vmem:[#allocation5 + $0x3f0] sm:$0xff]
    %v234 = vld [vmem:[#allocation5 + $0x3f8] sm:$0xff]
    %v235 = vld [vmem:[%s2] sm:$0x1]
    %v237 = vlaneseq
    %v238 = vshrl.u32 %v237, 7
    %v239 = vsub.s32 0, %v238
    %v240 = vrot.slane %v235, %v239
    %242 = vmatprep.subr.mxu0 0.0
    %243 = vmatpush1.msra.mxu0 %v107
    %244 = vmatprep.subr.mxu0 0.0
    %245 = vmatpush1.msra.mxu0 %v108
    %246 = vmatprep.subr.mxu0 0.0
    %247 = vmatpush1.msra.mxu0 %v109
    %248 = vmatprep.subr.mxu0 0.0
    %249 = vmatpush1.msra.mxu0 %v110
    %250 = vmatprep.subr.mxu0 0.0
    %251 = vmatpush1.msra.mxu0 %v111
    %252 = vmatprep.subr.mxu0 0.0
    %253 = vmatpush1.msra.mxu0 %v112
    %254 = vmatprep.subr.mxu0 0.0
    %255 = vmatpush1.msra.mxu0 %v113
    %256 = vmatprep.subr.mxu0 0.0
    %257 = vmatpush1.msra.mxu0 %v114
    %258 = vmatprep.subr.mxu0 0.0
    %259 = vmatpush1.msra.mxu0 %v115
    %260 = vmatprep.subr.mxu0 0.0
    %261 = vmatpush1.msra.mxu0 %v116
    %262 = vmatprep.subr.mxu0 0.0
    %263 = vmatpush1.msra.mxu0 %v117
    %264 = vmatprep.subr.mxu0 0.0
    %265 = vmatpush1.msra.mxu0 %v118
    %266 = vmatprep.subr.mxu0 0.0
    %267 = vmatpush1.msra.mxu0 %v119
    %268 = vmatprep.subr.mxu0 0.0
    %269 = vmatpush1.msra.mxu0 %v120
    %270 = vmatprep.subr.mxu0 0.0
    %271 = vmatpush1.msra.mxu0 %v121
    %272 = vmatprep.subr.mxu0 0.0
    %273 = vmatpush1.msra.mxu0 %v122
    %274 = vmatprep.subr.mxu0 0.0
    %275 = vmatpush1.msra.mxu0 %v123
    %276 = vmatprep.subr.mxu0 0.0
    %277 = vmatpush1.msra.mxu0 %v124
    %278 = vmatprep.subr.mxu0 0.0
    %279 = vmatpush1.msra.mxu0 %v125
    %280 = vmatprep.subr.mxu0 0.0
    %281 = vmatpush1.msra.mxu0 %v126
    %282 = vmatprep.subr.mxu0 0.0
    %283 = vmatpush1.msra.mxu0 %v127
    %284 = vmatprep.subr.mxu0 0.0
    %285 = vmatpush1.msra.mxu0 %v128
    %286 = vmatprep.subr.mxu0 0.0
    %287 = vmatpush1.msra.mxu0 %v129
    %288 = vmatprep.subr.mxu0 0.0
    %289 = vmatpush1.msra.mxu0 %v130
    %290 = vmatprep.subr.mxu0 0.0
    %291 = vmatpush1.msra.mxu0 %v131
    %292 = vmatprep.subr.mxu0 0.0
    %293 = vmatpush1.msra.mxu0 %v132
    %294 = vmatprep.subr.mxu0 0.0
    %295 = vmatpush1.msra.mxu0 %v133
    %296 = vmatprep.subr.mxu0 0.0
    %297 = vmatpush1.msra.mxu0 %v134
    %298 = vmatprep.subr.mxu0 0.0
    %299 = vmatpush1.msra.mxu0 %v135
    %300 = vmatprep.subr.mxu0 0.0
    %301 = vmatpush1.msra.mxu0 %v136
    %302 = vmatprep.subr.mxu0 0.0
    %303 = vmatpush1.msra.mxu0 %v137
    %304 = vmatprep.subr.mxu0 0.0
    %305 = vmatpush1.msra.mxu0 %v138
    %306 = vmatprep.mubr.f32.mxu0 %v100
    %307 = vmatmul.mubr.f32.gmra.mrb[0].mxu0 %v99
    %v308 = vpop.f32.mrb[0].mxu0
    %v309 = vadd.f32 %v240, %v308
    %v310 = vpop.f32.mrb[0].mxu0
    %311 = vdwg.mxu0
    %312 = vmatprep.subr.mxu0 0.0
    %313 = vmatpush1.msra.mxu0 %v139
    %314 = vmatprep.subr.mxu0 0.0
    %315 = vmatpush1.msra.mxu0 %v140
    %316 = vmatprep.subr.mxu0 0.0
    %317 = vmatpush1.msra.mxu0 %v141
    %318 = vmatprep.subr.mxu0 0.0
    %319 = vmatpush1.msra.mxu0 %v142
    %320 = vmatprep.subr.mxu0 0.0
    %321 = vmatpush1.msra.mxu0 %v143
    %322 = vmatprep.subr.mxu0 0.0
    %323 = vmatpush1.msra.mxu0 %v144
    %324 = vmatprep.subr.mxu0 0.0
    %325 = vmatpush1.msra.mxu0 %v145
    %326 = vmatprep.subr.mxu0 0.0
    %327 = vmatpush1.msra.mxu0 %v146
    %328 = vmatprep.subr.mxu0 0.0
    %329 = vmatpush1.msra.mxu0 %v147
    %330 = vmatprep.subr.mxu0 0.0
    %331 = vmatpush1.msra.mxu0 %v148
    %332 = vmatprep.subr.mxu0 0.0
    %333 = vmatpush1.msra.mxu0 %v149
    %334 = vmatprep.subr.mxu0 0.0
    %335 = vmatpush1.msra.mxu0 %v150
    %336 = vmatprep.subr.mxu0 0.0
    %337 = vmatpush1.msra.mxu0 %v151
    %338 = vmatprep.subr.mxu0 0.0
    %339 = vmatpush1.msra.mxu0 %v152
    %340 = vmatprep.subr.mxu0 0.0
    %341 = vmatpush1.msra.mxu0 %v153
    %342 = vmatprep.subr.mxu0 0.0
    %343 = vmatpush1.msra.mxu0 %v154
    %344 = vmatprep.subr.mxu0 0.0
    %345 = vmatpush1.msra.mxu0 %v155
    %346 = vmatprep.subr.mxu0 0.0
    %347 = vmatpush1.msra.mxu0 %v156
    %348 = vmatprep.subr.mxu0 0.0
    %349 = vmatpush1.msra.mxu0 %v157
    %350 = vmatprep.subr.mxu0 0.0
    %351 = vmatpush1.msra.mxu0 %v158
    %352 = vmatprep.subr.mxu0 0.0
    %353 = vmatpush1.msra.mxu0 %v159
    %354 = vmatprep.subr.mxu0 0.0
    %355 = vmatpush1.msra.mxu0 %v160
    %356 = vmatprep.subr.mxu0 0.0
    %357 = vmatpush1.msra.mxu0 %v161
    %358 = vmatprep.subr.mxu0 0.0
    %359 = vmatpush1.msra.mxu0 %v162
    %360 = vmatprep.subr.mxu0 0.0
    %361 = vmatpush1.msra.mxu0 %v163
    %362 = vmatprep.subr.mxu0 0.0
    %363 = vmatpush1.msra.mxu0 %v164
    %364 = vmatprep.subr.mxu0 0.0
    %365 = vmatpush1.msra.mxu0 %v165
    %366 = vmatprep.subr.mxu0 0.0
    %367 = vmatpush1.msra.mxu0 %v166
    %368 = vmatprep.subr.mxu0 0.0
    %369 = vmatpush1.msra.mxu0 %v167
    %370 = vmatprep.subr.mxu0 0.0
    %371 = vmatpush1.msra.mxu0 %v168
    %372 = vmatprep.subr.mxu0 0.0
    %373 = vmatpush1.msra.mxu0 %v169
    %374 = vmatprep.subr.mxu0 0.0
    %375 = vmatpush1.msra.mxu0 %v170
    %376 = vmatprep.mubr.f32.mxu0 %v102
    %377 = vmatmul.mubr.f32.gmra.mrb[0].mxu0 %v101
    %v378 = vpop.f32.mrb[0].mxu0
    %v379 = vadd.f32 %v309, %v378
    %v380 = vpop.f32.mrb[0].mxu0
    %381 = vdwg.mxu0
    %382 = vmatprep.subr.mxu0 0.0
    %383 = vmatpush1.msra.mxu0 %v171
    %384 = vmatprep.subr.mxu0 0.0
    %385 = vmatpush1.msra.mxu0 %v172
    %386 = vmatprep.subr.mxu0 0.0
    %387 = vmatpush1.msra.mxu0 %v173
    %388 = vmatprep.subr.mxu0 0.0
    %389 = vmatpush1.msra.mxu0 %v174
    %390 = vmatprep.subr.mxu0 0.0
    %391 = vmatpush1.msra.mxu0 %v175
    %392 = vmatprep.subr.mxu0 0.0
    %393 = vmatpush1.msra.mxu0 %v176
    %394 = vmatprep.subr.mxu0 0.0
    %395 = vmatpush1.msra.mxu0 %v177
    %396 = vmatprep.subr.mxu0 0.0
    %397 = vmatpush1.msra.mxu0 %v178
    %398 = vmatprep.subr.mxu0 0.0
    %399 = vmatpush1.msra.mxu0 %v179
    %400 = vmatprep.subr.mxu0 0.0
    %401 = vmatpush1.msra.mxu0 %v180
    %402 = vmatprep.subr.mxu0 0.0
    %403 = vmatpush1.msra.mxu0 %v181
    %404 = vmatprep.subr.mxu0 0.0
    %405 = vmatpush1.msra.mxu0 %v182
    %406 = vmatprep.subr.mxu0 0.0
    %407 = vmatpush1.msra.mxu0 %v183
    %408 = vmatprep.subr.mxu0 0.0
    %409 = vmatpush1.msra.mxu0 %v184
    %410 = vmatprep.subr.mxu0 0.0
    %411 = vmatpush1.msra.mxu0 %v185
    %412 = vmatprep.subr.mxu0 0.0
    %413 = vmatpush1.msra.mxu0 %v186
    %414 = vmatprep.subr.mxu0 0.0
    %415 = vmatpush1.msra.mxu0 %v187
    %416 = vmatprep.subr.mxu0 0.0
    %417 = vmatpush1.msra.mxu0 %v188
    %418 = vmatprep.subr.mxu0 0.0
    %419 = vmatpush1.msra.mxu0 %v189
    %420 = vmatprep.subr.mxu0 0.0
    %421 = vmatpush1.msra.mxu0 %v190
    %422 = vmatprep.subr.mxu0 0.0
    %423 = vmatpush1.msra.mxu0 %v191
    %424 = vmatprep.subr.mxu0 0.0
    %425 = vmatpush1.msra.mxu0 %v192
    %426 = vmatprep.subr.mxu0 0.0
    %427 = vmatpush1.msra.mxu0 %v193
    %428 = vmatprep.subr.mxu0 0.0
    %429 = vmatpush1.msra.mxu0 %v194
    %430 = vmatprep.subr.mxu0 0.0
    %431 = vmatpush1.msra.mxu0 %v195
    %432 = vmatprep.subr.mxu0 0.0
    %433 = vmatpush1.msra.mxu0 %v196
    %434 = vmatprep.subr.mxu0 0.0
    %435 = vmatpush1.msra.mxu0 %v197
    %436 = vmatprep.subr.mxu0 0.0
    %437 = vmatpush1.msra.mxu0 %v198
    %438 = vmatprep.subr.mxu0 0.0
    %439 = vmatpush1.msra.mxu0 %v199
    %440 = vmatprep.subr.mxu0 0.0
    %441 = vmatpush1.msra.mxu0 %v200
    %442 = vmatprep.subr.mxu0 0.0
    %443 = vmatpush1.msra.mxu0 %v201
    %444 = vmatprep.subr.mxu0 0.0
    %445 = vmatpush1.msra.mxu0 %v202
    %446 = vmatprep.mubr.f32.mxu0 %v104
    %447 = vmatmul.mubr.f32.gmra.mrb[0].mxu0 %v103
    %v448 = vpop.f32.mrb[0].mxu0
    %v449 = vadd.f32 %v379, %v448
    %v450 = vpop.f32.mrb[0].mxu0
    %451 = vdwg.mxu0
    %452 = vmatprep.subr.mxu0 0.0
    %453 = vmatpush1.msra.mxu0 %v203
    %454 = vmatprep.subr.mxu0 0.0
    %455 = vmatpush1.msra.mxu0 %v204
    %456 = vmatprep.subr.mxu0 0.0
    %457 = vmatpush1.msra.mxu0 %v205
    %458 = vmatprep.subr.mxu0 0.0
    %459 = vmatpush1.msra.mxu0 %v206
    %460 = vmatprep.subr.mxu0 0.0
    %461 = vmatpush1.msra.mxu0 %v207
    %462 = vmatprep.subr.mxu0 0.0
    %463 = vmatpush1.msra.mxu0 %v208
    %464 = vmatprep.subr.mxu0 0.0
    %465 = vmatpush1.msra.mxu0 %v209
    %466 = vmatprep.subr.mxu0 0.0
    %467 = vmatpush1.msra.mxu0 %v210
    %468 = vmatprep.subr.mxu0 0.0
    %469 = vmatpush1.msra.mxu0 %v211
    %470 = vmatprep.subr.mxu0 0.0
    %471 = vmatpush1.msra.mxu0 %v212
    %472 = vmatprep.subr.mxu0 0.0
    %473 = vmatpush1.msra.mxu0 %v213
    %474 = vmatprep.subr.mxu0 0.0
    %475 = vmatpush1.msra.mxu0 %v214
    %476 = vmatprep.subr.mxu0 0.0
    %477 = vmatpush1.msra.mxu0 %v215
    %478 = vmatprep.subr.mxu0 0.0
    %479 = vmatpush1.msra.mxu0 %v216
    %480 = vmatprep.subr.mxu0 0.0
    %481 = vmatpush1.msra.mxu0 %v217
    %482 = vmatprep.subr.mxu0 0.0
    %483 = vmatpush1.msra.mxu0 %v218
    %484 = vmatprep.subr.mxu0 0.0
    %485 = vmatpush1.msra.mxu0 %v219
    %486 = vmatprep.subr.mxu0 0.0
    %487 = vmatpush1.msra.mxu0 %v220
    %488 = vmatprep.subr.mxu0 0.0
    %489 = vmatpush1.msra.mxu0 %v221
    %490 = vmatprep.subr.mxu0 0.0
    %491 = vmatpush1.msra.mxu0 %v222
    %492 = vmatprep.subr.mxu0 0.0
    %493 = vmatpush1.msra.mxu0 %v223
    %494 = vmatprep.subr.mxu0 0.0
    %495 = vmatpush1.msra.mxu0 %v224
    %496 = vmatprep.subr.mxu0 0.0
    %497 = vmatpush1.msra.mxu0 %v225
    %498 = vmatprep.subr.mxu0 0.0
    %499 = vmatpush1.msra.mxu0 %v226
    %500 = vmatprep.subr.mxu0 0.0
    %501 = vmatpush1.msra.mxu0 %v227
    %502 = vmatprep.subr.mxu0 0.0
    %503 = vmatpush1.msra.mxu0 %v228
    %504 = vmatprep.subr.mxu0 0.0
    %505 = vmatpush1.msra.mxu0 %v229
    %506 = vmatprep.subr.mxu0 0.0
    %507 = vmatpush1.msra.mxu0 %v230
    %508 = vmatprep.subr.mxu0 0.0
    %509 = vmatpush1.msra.mxu0 %v231
    %510 = vmatprep.subr.mxu0 0.0
    %511 = vmatpush1.msra.mxu0 %v232
    %512 = vmatprep.subr.mxu0 0.0
    %513 = vmatpush1.msra.mxu0 %v233
    %514 = vmatprep.subr.mxu0 0.0
    %515 = vmatpush1.msra.mxu0 %v234
    %516 = vmatprep.mubr.f32.mxu0 %v106
    %517 = vmatmul.mubr.f32.gmra.mrb[0].mxu0 %v105
    %v518 = vpop.f32.mrb[0].mxu0
    %v519 = vadd.f32 %v449, %v518
    %v520 = vpop.f32.mrb[0].mxu0
    %521 = vdwg.mxu0
    %vm522 = vcmp.gt.f32.partialorder %v519, 0.0
    %v523 = vmul.f32 %v519, 0.2
    %v524 = vsel %vm522, %v519, %v523
    %v525 = vld [vmem:[#allocation7] sm:$0xff]
    %v526 = vld [vmem:[#allocation7 + $0x8] sm:$0xff]
    %v527 = vld [vmem:[#allocation7 + $0x10] sm:$0xff]
    %v528 = vld [vmem:[#allocation7 + $0x18] sm:$0xff]
    %v529 = vld [vmem:[#allocation7 + $0x20] sm:$0xff]
    %v530 = vld [vmem:[#allocation7 + $0x28] sm:$0xff]
    %v531 = vld [vmem:[#allocation7 + $0x30] sm:$0xff]
    %v532 = vld [vmem:[#allocation7 + $0x38] sm:$0xff]
    %v533 = vld [vmem:[#allocation7 + $0x40] sm:$0xff]
    %v534 = vld [vmem:[#allocation7 + $0x48] sm:$0xff]
    %v535 = vld [vmem:[#allocation7 + $0x50] sm:$0xff]
    %v536 = vld [vmem:[#allocation7 + $0x58] sm:$0xff]
    %v537 = vld [vmem:[#allocation7 + $0x60] sm:$0xff]
    %v538 = vld [vmem:[#allocation7 + $0x68] sm:$0xff]
    %v539 = vld [vmem:[#allocation7 + $0x70] sm:$0xff]
    %v540 = vld [vmem:[#allocation7 + $0x78] sm:$0xff]
    %v541 = vld [vmem:[%s4] sm:$0x1]
    %v543 = vlaneseq
    %v544 = vshrl.u32 %v543, 7
    %v545 = vsub.s32 0, %v544
    %v546 = vrot.slane %v541, %v545
    %548 = vmatprep.subr.mxu0 0.0
    %549 = vmatpush1.msra.mxu0 %v525
    %550 = vmatprep.subr.mxu0 0.0
    %551 = vmatpush1.msra.mxu0 %v526
    %552 = vmatprep.subr.mxu0 0.0
    %553 = vmatpush1.msra.mxu0 %v527
    %554 = vmatprep.subr.mxu0 0.0
    %555 = vmatpush1.msra.mxu0 %v528
    %556 = vmatprep.subr.mxu0 0.0
    %557 = vmatpush1.msra.mxu0 %v529
    %558 = vmatprep.subr.mxu0 0.0
    %559 = vmatpush1.msra.mxu0 %v530
    %560 = vmatprep.subr.mxu0 0.0
    %561 = vmatpush1.msra.mxu0 %v531
    %562 = vmatprep.subr.mxu0 0.0
    %563 = vmatpush1.msra.mxu0 %v532
    %564 = vmatprep.subr.mxu0 0.0
    %565 = vmatpush1.msra.mxu0 %v533
    %566 = vmatprep.subr.mxu0 0.0
    %567 = vmatpush1.msra.mxu0 %v534
    %568 = vmatprep.subr.mxu0 0.0
    %569 = vmatpush1.msra.mxu0 %v535
    %570 = vmatprep.subr.mxu0 0.0
    %571 = vmatpush1.msra.mxu0 %v536
    %572 = vmatprep.subr.mxu0 0.0
    %573 = vmatpush1.msra.mxu0 %v537
    %574 = vmatprep.subr.mxu0 0.0
    %575 = vmatpush1.msra.mxu0 %v538
    %576 = vmatprep.subr.mxu0 0.0
    %577 = vmatpush1.msra.mxu0 %v539
    %578 = vmatprep.subr.mxu0 0.0
    %579 = vmatpush1.msra.mxu0 %v540
    %580 = vmatprep.subr.mxu0 0.0
    %581 = vmatpush1.msra.mxu0 0.0
    %582 = vmatprep.subr.mxu0 0.0
    %583 = vmatpush1.msra.mxu0 0.0
    %584 = vmatprep.subr.mxu0 0.0
    %585 = vmatpush1.msra.mxu0 0.0
    %586 = vmatprep.subr.mxu0 0.0
    %587 = vmatpush1.msra.mxu0 0.0
    %588 = vmatprep.subr.mxu0 0.0
    %589 = vmatpush1.msra.mxu0 0.0
    %590 = vmatprep.subr.mxu0 0.0
    %591 = vmatpush1.msra.mxu0 0.0
    %592 = vmatprep.subr.mxu0 0.0
    %593 = vmatpush1.msra.mxu0 0.0
    %594 = vmatprep.subr.mxu0 0.0
    %595 = vmatpush1.msra.mxu0 0.0
    %596 = vmatprep.subr.mxu0 0.0
    %597 = vmatpush1.msra.mxu0 0.0
    %598 = vmatprep.subr.mxu0 0.0
    %599 = vmatpush1.msra.mxu0 0.0
    %600 = vmatprep.subr.mxu0 0.0
    %601 = vmatpush1.msra.mxu0 0.0
    %602 = vmatprep.subr.mxu0 0.0
    %603 = vmatpush1.msra.mxu0 0.0
    %604 = vmatprep.subr.mxu0 0.0
    %605 = vmatpush1.msra.mxu0 0.0
    %606 = vmatprep.subr.mxu0 0.0
    %607 = vmatpush1.msra.mxu0 0.0
    %608 = vmatprep.subr.mxu0 0.0
    %609 = vmatpush1.msra.mxu0 0.0
    %610 = vmatprep.subr.mxu0 0.0
    %611 = vmatpush1.msra.mxu0 0.0
    %612 = vmatprep.mubr.f32.mxu0 0.0
    %613 = vmatmul.mubr.f32.gmra.mrb[0].mxu0 %v524
    %v614 = vpop.f32.mrb[0].mxu0
    %v615 = vadd.f32 %v546, %v614
    %v616 = vpop.f32.mrb[0].mxu0
    %617 = vdwg.mxu0
    %vm618 = vcmp.gt.f32.partialorder %v615, 0.0
    %v619 = vmul.f32 %v615, 0.2
    %v620 = vsel %vm618, %v615, %v619
    %v621 = vld [vmem:[#allocation8] sm:$0xff]
    %v622 = vld [vmem:[#allocation8 + $0x8] sm:$0xff]
    %v623 = vld [vmem:[#allocation8 + $0x10] sm:$0xff]
    %v624 = vld [vmem:[#allocation8 + $0x18] sm:$0xff]
    %v625 = vld [vmem:[#allocation8 + $0x20] sm:$0xff]
    %v626 = vld [vmem:[#allocation8 + $0x28] sm:$0xff]
    %v627 = vld [vmem:[#allocation8 + $0x30] sm:$0xff]
    %v628 = vld [vmem:[#allocation8 + $0x38] sm:$0xff]
    %v629 = vld [vmem:[#allocation8 + $0x40] sm:$0xff]
    %v630 = vld [vmem:[#allocation8 + $0x48] sm:$0xff]
    %v631 = vld [vmem:[#allocation8 + $0x50] sm:$0xff]
    %v632 = vld [vmem:[#allocation8 + $0x58] sm:$0xff]
    %v633 = vld [vmem:[#allocation8 + $0x60] sm:$0xff]
    %v634 = vld [vmem:[#allocation8 + $0x68] sm:$0xff]
    %v635 = vld [vmem:[#allocation8 + $0x70] sm:$0xff]
    %v636 = vld [vmem:[#allocation8 + $0x78] sm:$0xff]
    %v637 = vld [vmem:[%s6] sm:$0x1]
    %v639 = vlaneseq
    %v640 = vshrl.u32 %v639, 7
    %v641 = vsub.s32 0, %v640
    %v642 = vrot.slane %v637, %v641
    %644 = vmatprep.subr.mxu0 0.0
    %645 = vmatpush1.msra.mxu0 %v621
    %646 = vmatprep.subr.mxu0 0.0
    %647 = vmatpush1.msra.mxu0 %v622
    %648 = vmatprep.subr.mxu0 0.0
    %649 = vmatpush1.msra.mxu0 %v623
    %650 = vmatprep.subr.mxu0 0.0
    %651 = vmatpush1.msra.mxu0 %v624
    %652 = vmatprep.subr.mxu0 0.0
    %653 = vmatpush1.msra.mxu0 %v625
    %654 = vmatprep.subr.mxu0 0.0
    %655 = vmatpush1.msra.mxu0 %v626
    %656 = vmatprep.subr.mxu0 0.0
    %657 = vmatpush1.msra.mxu0 %v627
    %658 = vmatprep.subr.mxu0 0.0
    %659 = vmatpush1.msra.mxu0 %v628
    %660 = vmatprep.subr.mxu0 0.0
    %661 = vmatpush1.msra.mxu0 %v629
    %662 = vmatprep.subr.mxu0 0.0
    %663 = vmatpush1.msra.mxu0 %v630
    %664 = vmatprep.subr.mxu0 0.0
    %665 = vmatpush1.msra.mxu0 %v631
    %666 = vmatprep.subr.mxu0 0.0
    %667 = vmatpush1.msra.mxu0 %v632
    %668 = vmatprep.subr.mxu0 0.0
    %669 = vmatpush1.msra.mxu0 %v633
    %670 = vmatprep.subr.mxu0 0.0
    %671 = vmatpush1.msra.mxu0 %v634
    %672 = vmatprep.subr.mxu0 0.0
    %673 = vmatpush1.msra.mxu0 %v635
    %674 = vmatprep.subr.mxu0 0.0
    %675 = vmatpush1.msra.mxu0 %v636
    %676 = vmatprep.subr.mxu0 0.0
    %677 = vmatpush1.msra.mxu0 0.0
    %678 = vmatprep.subr.mxu0 0.0
    %679 = vmatpush1.msra.mxu0 0.0
    %680 = vmatprep.subr.mxu0 0.0
    %681 = vmatpush1.msra.mxu0 0.0
    %682 = vmatprep.subr.mxu0 0.0
    %683 = vmatpush1.msra.mxu0 0.0
    %684 = vmatprep.subr.mxu0 0.0
    %685 = vmatpush1.msra.mxu0 0.0
    %686 = vmatprep.subr.mxu0 0.0
    %687 = vmatpush1.msra.mxu0 0.0
    %688 = vmatprep.subr.mxu0 0.0
    %689 = vmatpush1.msra.mxu0 0.0
    %690 = vmatprep.subr.mxu0 0.0
    %691 = vmatpush1.msra.mxu0 0.0
    %692 = vmatprep.subr.mxu0 0.0
    %693 = vmatpush1.msra.mxu0 0.0
    %694 = vmatprep.subr.mxu0 0.0
    %695 = vmatpush1.msra.mxu0 0.0
    %696 = vmatprep.subr.mxu0 0.0
    %697 = vmatpush1.msra.mxu0 0.0
    %698 = vmatprep.subr.mxu0 0.0
    %699 = vmatpush1.msra.mxu0 0.0
    %700 = vmatprep.subr.mxu0 0.0
    %701 = vmatpush1.msra.mxu0 0.0
    %702 = vmatprep.subr.mxu0 0.0
    %703 = vmatpush1.msra.mxu0 0.0
    %704 = vmatprep.subr.mxu0 0.0
    %705 = vmatpush1.msra.mxu0 0.0
    %706 = vmatprep.subr.mxu0 0.0
    %707 = vmatpush1.msra.mxu0 0.0
    %708 = vmatprep.mubr.f32.mxu0 0.0
    %709 = vmatmul.mubr.f32.gmra.mrb[0].mxu0 %v620
    %v710 = vpop.f32.mrb[0].mxu0
    %v711 = vadd.f32 %v642, %v710
    %v712 = vpop.f32.mrb[0].mxu0
    %713 = vdwg.mxu0
    %vm714 = vcmp.gt.f32.partialorder %v711, 0.0
    %v715 = vmul.f32 %v711, 0.2
    %v716 = vsel %vm714, %v711, %v715
    %v717 = vld [vmem:[#allocation10] sm:$0xff]
    %v718 = vld [vmem:[#allocation10 + $0x8] sm:$0xff]
    %v719 = vld [vmem:[#allocation10 + $0x10] sm:$0xff]
    %v720 = vld [vmem:[#allocation10 + $0x18] sm:$0xff]
    %v721 = vld [vmem:[#allocation10 + $0x20] sm:$0xff]
    %v722 = vld [vmem:[#allocation10 + $0x28] sm:$0xff]
    %v723 = vld [vmem:[#allocation10 + $0x30] sm:$0xff]
    %v724 = vld [vmem:[#allocation10 + $0x38] sm:$0xff]
    %v725 = vld [vmem:[#allocation10 + $0x40] sm:$0xff]
    %v726 = vld [vmem:[#allocation10 + $0x48] sm:$0xff]
    %v727 = vld [vmem:[#allocation10 + $0x50] sm:$0xff]
    %v728 = vld [vmem:[#allocation10 + $0x58] sm:$0xff]
    %v729 = vld [vmem:[#allocation10 + $0x60] sm:$0xff]
    %v730 = vld [vmem:[#allocation10 + $0x68] sm:$0xff]
    %v731 = vld [vmem:[#allocation10 + $0x70] sm:$0xff]
    %v732 = vld [vmem:[#allocation10 + $0x78] sm:$0xff]
    %v733 = vld [vmem:[%s8] sm:$0x1]
    %v735 = vlaneseq
    %v736 = vshrl.u32 %v735, 7
    %v737 = vsub.s32 0, %v736
    %v738 = vrot.slane %v733, %v737
    %740 = vmatprep.subr.mxu0 0.0
    %741 = vmatpush1.msra.mxu0 %v717
    %742 = vmatprep.subr.mxu0 0.0
    %743 = vmatpush1.msra.mxu0 %v718
    %744 = vmatprep.subr.mxu0 0.0
    %745 = vmatpush1.msra.mxu0 %v719
    %746 = vmatprep.subr.mxu0 0.0
    %747 = vmatpush1.msra.mxu0 %v720
    %748 = vmatprep.subr.mxu0 0.0
    %749 = vmatpush1.msra.mxu0 %v721
    %750 = vmatprep.subr.mxu0 0.0
    %751 = vmatpush1.msra.mxu0 %v722
    %752 = vmatprep.subr.mxu0 0.0
    %753 = vmatpush1.msra.mxu0 %v723
    %754 = vmatprep.subr.mxu0 0.0
    %755 = vmatpush1.msra.mxu0 %v724
    %756 = vmatprep.subr.mxu0 0.0
    %757 = vmatpush1.msra.mxu0 %v725
    %758 = vmatprep.subr.mxu0 0.0
    %759 = vmatpush1.msra.mxu0 %v726
    %760 = vmatprep.subr.mxu0 0.0
    %761 = vmatpush1.msra.mxu0 %v727
    %762 = vmatprep.subr.mxu0 0.0
    %763 = vmatpush1.msra.mxu0 %v728
    %764 = vmatprep.subr.mxu0 0.0
    %765 = vmatpush1.msra.mxu0 %v729
    %766 = vmatprep.subr.mxu0 0.0
    %767 = vmatpush1.msra.mxu0 %v730
    %768 = vmatprep.subr.mxu0 0.0
    %769 = vmatpush1.msra.mxu0 %v731
    %770 = vmatprep.subr.mxu0 0.0
    %771 = vmatpush1.msra.mxu0 %v732
    %772 = vmatprep.subr.mxu0 0.0
    %773 = vmatpush1.msra.mxu0 0.0
    %774 = vmatprep.subr.mxu0 0.0
    %775 = vmatpush1.msra.mxu0 0.0
    %776 = vmatprep.subr.mxu0 0.0
    %777 = vmatpush1.msra.mxu0 0.0
    %778 = vmatprep.subr.mxu0 0.0
    %779 = vmatpush1.msra.mxu0 0.0
    %780 = vmatprep.subr.mxu0 0.0
    %781 = vmatpush1.msra.mxu0 0.0
    %782 = vmatprep.subr.mxu0 0.0
    %783 = vmatpush1.msra.mxu0 0.0
    %784 = vmatprep.subr.mxu0 0.0
    %785 = vmatpush1.msra.mxu0 0.0
    %786 = vmatprep.subr.mxu0 0.0
    %787 = vmatpush1.msra.mxu0 0.0
    %788 = vmatprep.subr.mxu0 0.0
    %789 = vmatpush1.msra.mxu0 0.0
    %790 = vmatprep.subr.mxu0 0.0
    %791 = vmatpush1.msra.mxu0 0.0
    %792 = vmatprep.subr.mxu0 0.0
    %793 = vmatpush1.msra.mxu0 0.0
    %794 = vmatprep.subr.mxu0 0.0
    %795 = vmatpush1.msra.mxu0 0.0
    %796 = vmatprep.subr.mxu0 0.0
    %797 = vmatpush1.msra.mxu0 0.0
    %798 = vmatprep.subr.mxu0 0.0
    %799 = vmatpush1.msra.mxu0 0.0
    %800 = vmatprep.subr.mxu0 0.0
    %801 = vmatpush1.msra.mxu0 0.0
    %802 = vmatprep.subr.mxu0 0.0
    %803 = vmatpush1.msra.mxu0 0.0
    %804 = vmatprep.mubr.f32.mxu0 0.0
    %805 = vmatmul.mubr.f32.gmra.mrb[0].mxu0 %v716
    %v806 = vpop.f32.mrb[0].mxu0
    %v807 = vadd.f32 %v738, %v806
    %v808 = vpop.f32.mrb[0].mxu0
    %809 = vdwg.mxu0
    %810 = vst [vmem:[#allocation11] sm:$0xff] %v807
    // Predicated region
    $region58: #{tpu_custom_call.1} parent=1 // pred_check
      _
    $region59: #{tpu_custom_call.1} parent=1 // pred_check_branch
      %812 = sbr.rel (0) target = $region61
    $region60: #{tpu_custom_call.1} parent=1 // pred_region
      %s814 = ssub.s32 128, 128
      %815 = vsyncadd [#allocation4], %s814
      %s817 = sshll.u32 [#allocation11], 4
      %s818 = int_to_ptr.vmem [resolvable:$true] %s817
      %820 = dma.vmem_to_hbm [thread:$0]  %s818, 128, %s9, [#allocation4]
    $region61: #{tpu_custom_call.1} parent=1 // pred_fallthru
      _
    // Predicated region
    $region62: #{tpu_custom_call.1} parent=1 // pred_check
      _
    $region63: #{tpu_custom_call.1} parent=1 // pred_check_branch
      %822 = sbr.rel (0) target = $region65
    $region64: #{tpu_custom_call.1} parent=1 // pred_region
      %823 = dma.done [#allocation4], 128
    $region65: #{tpu_custom_call.1} parent=1 // pred_fallthru
      _
    %824 = vsyncpa [#allocation3], 1
    %825 = vsyncpa [#allocation6], 1
    %826 = vsyncpa [#allocation9], 1
    %827 = vsyncpa [#allocation4], 1

</llo_original>
